<compile_context>
chip_gen: v5e
topology: v5e:2x2
jax: 0.10.0
libtpu: 0.0.40
codegen_flags: <defaults>
</compile_context>

<pallas_src>
import jax
import jax.numpy as jnp
from jax.experimental import pallas as pl
from jax.experimental.pallas import tpu as pltpu

IN_FEATURES = 4
HIDDEN = 128
LANES = 128


# --------------------------------------------------------------------------- #
# Kernel
# --------------------------------------------------------------------------- #
def qnet_kernel(x_ref, w1_ref, b1_ref, w2_ref, b2_ref, w3_ref, b3_ref, o_ref):
    x = x_ref[...].astype(jnp.float32)                  # (TB, 4)

    # ---- Layer 1 on the VPU: K=4 contraction as unrolled broadcast-MACs. ----
    w1 = w1_ref[...].astype(jnp.float32)                # (4, 128)
    h = b1_ref[...] + x[:, 0:1] * w1[0:1, :]            # -> (TB, 128)
    for k in range(1, IN_FEATURES):                     # unrolled at trace time
        h = h + x[:, k:k + 1] * w1[k:k + 1, :]
    h = jnp.maximum(h, 0.0)

    # ---- Layer 2 on the MXU (operands in weight dtype, f32 accumulation). ---
    w2 = w2_ref[...]
    h = jnp.dot(h.astype(w2.dtype), w2,
                preferred_element_type=jnp.float32) + b2_ref[...]
    h = jnp.maximum(h, 0.0)

    # ---- Layer 3 on the MXU; output columns zero-padded to 128 lanes. -------
    w3 = w3_ref[...]
    out = jnp.dot(h.astype(w3.dtype), w3,
                  preferred_element_type=jnp.float32) + b3_ref[...]
    o_ref[...] = out.astype(o_ref.dtype)


# --------------------------------------------------------------------------- #
# One-time parameter preparation (hoisted out of the per-call forward)
# --------------------------------------------------------------------------- #
def prepare_qnet_params(params, *, weight_dtype=None):
    """Pad the final layer to 128 output lanes and optionally cast weights.

    Do this ONCE (e.g. after each optimizer step / target-net sync), not per
    forward call.  Pass weight_dtype=jnp.bfloat16 on any generation
    (v5e/v6e/v7x MXUs are all bf16-native) to halve weight DMA; biases stay
    f32 since the bias+ReLU epilogue runs in f32 on the VPU.
    """
    w1, b1, w2, b2, w3, b3 = params
    a = w3.shape[1]
    a_pad = ((a + LANES - 1) // LANES) * LANES
    if a_pad != a:
        w3 = jnp.pad(w3, ((0, 0), (0, a_pad - a)))
        b3 = jnp.pad(b3, ((0, 0), (0, a_pad - a)))
    if weight_dtype is not None:
        w1, w2, w3 = (w.astype(weight_dtype) for w in (w1, w2, w3))
    return (w1, b1, w2, b2, w3, b3)


def _default_num_batch_tiles():
    # v7x has 2 TensorCores per chip; v5e/v6e have 1.  One batch tile per TC.
    try:
        kind = jax.devices()[0].device_kind.lower()
        if "v7" in kind:
            return 2
    except Exception:  # pragma: no cover - defensive, never fail the forward
        pass
    return 1


# --------------------------------------------------------------------------- #
# Forward wrapper
# --------------------------------------------------------------------------- #
def qnet_forward(x, prepared_params, action_size, *,
                 num_batch_tiles=None, out_dtype=jnp.float32):
    """x: (B, 4) f32.  prepared_params: output of prepare_qnet_params."""
    w1, b1, w2, b2, w3, b3 = prepared_params
    B = x.shape[0]
    a_pad = w3.shape[1]

    if num_batch_tiles is None:
        num_batch_tiles = _default_num_batch_tiles()
    num_batch_tiles = max(1, int(num_batch_tiles))

    # One sublane-aligned tile per TensorCore; grid steps == TC count.
    tb = ((max(1, -(-B // num_batch_tiles)) + 7) // 8) * 8
    b_pad = tb * num_batch_tiles
    xp = jnp.pad(x, ((0, b_pad - B), (0, 0))) if b_pad != B else x
    grid = (num_batch_tiles,)

    def weight_spec(shape):
        # Constant block index -> parameter stays VMEM-resident across tiles.
        return pl.BlockSpec(shape, lambda i: (0, 0))

    flops = 2 * b_pad * (IN_FEATURES * HIDDEN + HIDDEN * HIDDEN + HIDDEN * a_pad)
    bytes_accessed = (
        int(xp.size) * xp.dtype.itemsize
        + sum(int(p.size) * p.dtype.itemsize for p in (w1, b1, w2, b2, w3, b3))
        + b_pad * a_pad * jnp.dtype(out_dtype).itemsize
    )

    out = pl.pallas_call(
        qnet_kernel,
        out_shape=jax.ShapeDtypeStruct((b_pad, a_pad), out_dtype),
        grid=grid,
        in_specs=[
            pl.BlockSpec((tb, IN_FEATURES), lambda i: (i, 0)),   # x walks batch
            weight_spec(w1.shape), weight_spec(b1.shape),
            weight_spec(w2.shape), weight_spec(b2.shape),
            weight_spec(w3.shape), weight_spec(b3.shape),
        ],
        out_specs=pl.BlockSpec((tb, a_pad), lambda i: (i, 0)),
        compiler_params=pltpu.CompilerParams(
            dimension_semantics=("parallel",)),   # v7x: 2 TCs split the batch axis
        cost_estimate=pl.CostEstimate(
            flops=flops, transcendentals=0, bytes_accessed=bytes_accessed),
    )(xp, w1, b1, w2, b2, w3, b3)

    return out[:B, :action_size]


# --------------------------------------------------------------------------- #
# Init + pure-JAX reference
# --------------------------------------------------------------------------- #
def init_qnet_params(key, action_size):
    """Mimics nn.Linear default init (uniform +-1/sqrt(fan_in)).

    Weights stored as [in_features, out_features]; biases as (1, out) rows.
    """
    def linear(k, fan_in, fan_out):
        kw, kb = jax.random.split(k)
        bound = 1.0 / jnp.sqrt(jnp.float32(fan_in))
        w = jax.random.uniform(kw, (fan_in, fan_out), jnp.float32, -bound, bound)
        b = jax.random.uniform(kb, (1, fan_out), jnp.float32, -bound, bound)
        return w, b

    k1, k2, k3 = jax.random.split(key, 3)
    w1, b1 = linear(k1, IN_FEATURES, HIDDEN)
    w2, b2 = linear(k2, HIDDEN, HIDDEN)
    w3, b3 = linear(k3, HIDDEN, action_size)
    return (w1, b1, w2, b2, w3, b3)


def qnet_reference(x, params):
    w1, b1, w2, b2, w3, b3 = params
    h = jax.nn.relu(x @ w1 + b1)
    h = jax.nn.relu(h @ w2 + b2)
    return h @ w3 + b3


# --------------------------------------------------------------------------- #
# Self-test
# --------------------------------------------------------------------------- #
if __name__ == "__main__":
    key = jax.random.PRNGKey(0)
    kx, kp = jax.random.split(key)

    action_size = 2            # CartPole
    batch = 32                 # small replay-minibatch-sized batch

    x = jax.random.normal(kx, (batch, IN_FEATURES), jnp.float32)
    raw_params = init_qnet_params(kp, action_size)
    ref = qnet_reference(x, raw_params)

    # f32 weights, generation-default grid (1 tile on v5e/v6e, 2 on v7x).
    prepped = prepare_qnet_params(raw_params)
    out = jax.block_until_ready(qnet_forward(x, prepped, action_size))
    assert out.shape == (batch, action_size)
    assert jnp.allclose(out, ref, atol=1e-3, rtol=1e-3), "f32 mismatch vs reference"

    # Explicit two-tile grid (exercises the multi-step / v7x path on any chip).
    out2 = jax.block_until_ready(
        qnet_forward(x, prepped, action_size, num_batch_tiles=2))
    assert jnp.allclose(out2, ref, atol=1e-3, rtol=1e-3), "2-tile mismatch"

    # Ragged batch (exercises batch padding + output slicing).
    out_small = jax.block_until_ready(qnet_forward(x[:5], prepped, action_size))
    assert out_small.shape == (5, action_size)
    assert jnp.allclose(out_small, ref[:5], atol=1e-3, rtol=1e-3), "ragged mismatch"

    # bf16 weights (fast path on v5e/v6e/v7x): bf16 MXU operands, f32 accumulation.
    prepped_bf16 = prepare_qnet_params(raw_params, weight_dtype=jnp.bfloat16)
    out_bf16 = jax.block_until_ready(qnet_forward(x, prepped_bf16, action_size))
    assert jnp.allclose(out_bf16, ref, atol=5e-2, rtol=5e-2), "bf16 mismatch"

    print("KERNEL_OK")
</pallas_src>

<mosaic_0001>
module attributes {stable_mosaic.version = 11 : i64} {
  func.func @qnet_kernel(%arg0: i32, %arg1: memref<32x4xf32, #tpu.memory_space<vmem>>, %arg2: memref<4x128xf32, #tpu.memory_space<vmem>>, %arg3: memref<1x128xf32, #tpu.memory_space<vmem>>, %arg4: memref<128x128xf32, #tpu.memory_space<vmem>>, %arg5: memref<1x128xf32, #tpu.memory_space<vmem>>, %arg6: memref<128x128xf32, #tpu.memory_space<vmem>>, %arg7: memref<1x128xf32, #tpu.memory_space<vmem>>, %arg8: memref<32x128xf32, #tpu.memory_space<vmem>>) attributes {dimension_semantics = [#tpu.dimension_semantics<parallel>], iteration_bounds = array<i64: 1>, scalar_prefetch = 0 : i64, scratch_operands = 0 : i64, tpu.core_type = #tpu.core_type<tc>, window_params = [{transform_indices = @transform_0, window_bounds = array<i64: 32, 4>}, {pipeline_mode = #tpu.pipeline_mode<synchronous>, transform_indices = @transform_1, window_bounds = array<i64: 4, 128>}, {pipeline_mode = #tpu.pipeline_mode<synchronous>, transform_indices = @transform_2, window_bounds = array<i64: 1, 128>}, {pipeline_mode = #tpu.pipeline_mode<synchronous>, transform_indices = @transform_3, window_bounds = array<i64: 128, 128>}, {pipeline_mode = #tpu.pipeline_mode<synchronous>, transform_indices = @transform_4, window_bounds = array<i64: 1, 128>}, {pipeline_mode = #tpu.pipeline_mode<synchronous>, transform_indices = @transform_5, window_bounds = array<i64: 128, 128>}, {pipeline_mode = #tpu.pipeline_mode<synchronous>, transform_indices = @transform_6, window_bounds = array<i64: 1, 128>}, {transform_indices = @transform_7, window_bounds = array<i64: 32, 128>}]} {
    %c0 = arith.constant 0 : index
    %c0_0 = arith.constant 0 : index
    %0 = vector.load %arg1[%c0, %c0_0] : memref<32x4xf32, #tpu.memory_space<vmem>>, vector<32x4xf32>
    %c0_1 = arith.constant 0 : index
    %c0_2 = arith.constant 0 : index
    %1 = vector.load %arg2[%c0_1, %c0_2] : memref<4x128xf32, #tpu.memory_space<vmem>>, vector<4x128xf32>
    %c0_3 = arith.constant 0 : index
    %c0_4 = arith.constant 0 : index
    %2 = vector.load %arg3[%c0_3, %c0_4] : memref<1x128xf32, #tpu.memory_space<vmem>>, vector<1x128xf32>
    %3 = vector.extract_strided_slice %0 {offsets = [0, 0], sizes = [32, 1], strides = [1, 1]} : vector<32x4xf32> to vector<32x1xf32>
    %4 = vector.extract_strided_slice %1 {offsets = [0, 0], sizes = [1, 128], strides = [1, 1]} : vector<4x128xf32> to vector<1x128xf32>
    %5 = vector.broadcast %3 : vector<32x1xf32> to vector<32x128xf32>
    %6 = vector.broadcast %4 : vector<1x128xf32> to vector<32x128xf32>
    %7 = arith.mulf %5, %6 : vector<32x128xf32>
    %8 = vector.broadcast %2 : vector<1x128xf32> to vector<32x128xf32>
    %9 = arith.addf %8, %7 : vector<32x128xf32>
    %10 = vector.extract_strided_slice %0 {offsets = [0, 1], sizes = [32, 1], strides = [1, 1]} : vector<32x4xf32> to vector<32x1xf32>
    %11 = vector.extract_strided_slice %1 {offsets = [1, 0], sizes = [1, 128], strides = [1, 1]} : vector<4x128xf32> to vector<1x128xf32>
    %12 = vector.broadcast %10 : vector<32x1xf32> to vector<32x128xf32>
    %13 = vector.broadcast %11 : vector<1x128xf32> to vector<32x128xf32>
    %14 = arith.mulf %12, %13 : vector<32x128xf32>
    %15 = arith.addf %9, %14 : vector<32x128xf32>
    %16 = vector.extract_strided_slice %0 {offsets = [0, 2], sizes = [32, 1], strides = [1, 1]} : vector<32x4xf32> to vector<32x1xf32>
    %17 = vector.extract_strided_slice %1 {offsets = [2, 0], sizes = [1, 128], strides = [1, 1]} : vector<4x128xf32> to vector<1x128xf32>
    %18 = vector.broadcast %16 : vector<32x1xf32> to vector<32x128xf32>
    %19 = vector.broadcast %17 : vector<1x128xf32> to vector<32x128xf32>
    %20 = arith.mulf %18, %19 : vector<32x128xf32>
    %21 = arith.addf %15, %20 : vector<32x128xf32>
    %22 = vector.extract_strided_slice %0 {offsets = [0, 3], sizes = [32, 1], strides = [1, 1]} : vector<32x4xf32> to vector<32x1xf32>
    %23 = vector.extract_strided_slice %1 {offsets = [3, 0], sizes = [1, 128], strides = [1, 1]} : vector<4x128xf32> to vector<1x128xf32>
    %24 = vector.broadcast %22 : vector<32x1xf32> to vector<32x128xf32>
    %25 = vector.broadcast %23 : vector<1x128xf32> to vector<32x128xf32>
    %26 = arith.mulf %24, %25 : vector<32x128xf32>
    %27 = arith.addf %21, %26 : vector<32x128xf32>
    %cst = arith.constant 0.000000e+00 : f32
    %28 = vector.broadcast %cst : f32 to vector<32x128xf32>
    %29 = arith.maximumf %27, %28 : vector<32x128xf32>
    %c0_5 = arith.constant 0 : index
    %c0_6 = arith.constant 0 : index
    %30 = vector.load %arg4[%c0_5, %c0_6] : memref<128x128xf32, #tpu.memory_space<vmem>>, vector<128x128xf32>
    %cst_7 = arith.constant dense<0.000000e+00> : vector<32x128xf32>
    %31 = tpu.matmul %29, %30, %cst_7 {dimension_numbers = #tpu.dot_dimension_numbers<[1], [0], [0], [1], [0, 0, 1, 1], [], []>} : vector<32x128xf32>, vector<128x128xf32>, vector<32x128xf32> -> vector<32x128xf32>
    %c0_8 = arith.constant 0 : index
    %c0_9 = arith.constant 0 : index
    %32 = vector.load %arg5[%c0_8, %c0_9] : memref<1x128xf32, #tpu.memory_space<vmem>>, vector<1x128xf32>
    %33 = vector.broadcast %32 : vector<1x128xf32> to vector<32x128xf32>
    %34 = arith.addf %31, %33 : vector<32x128xf32>
    %cst_10 = arith.constant 0.000000e+00 : f32
    %35 = vector.broadcast %cst_10 : f32 to vector<32x128xf32>
    %36 = arith.maximumf %34, %35 : vector<32x128xf32>
    %c0_11 = arith.constant 0 : index
    %c0_12 = arith.constant 0 : index
    %37 = vector.load %arg6[%c0_11, %c0_12] : memref<128x128xf32, #tpu.memory_space<vmem>>, vector<128x128xf32>
    %cst_13 = arith.constant dense<0.000000e+00> : vector<32x128xf32>
    %38 = tpu.matmul %36, %37, %cst_13 {dimension_numbers = #tpu.dot_dimension_numbers<[1], [0], [0], [1], [0, 0, 1, 1], [], []>} : vector<32x128xf32>, vector<128x128xf32>, vector<32x128xf32> -> vector<32x128xf32>
    %c0_14 = arith.constant 0 : index
    %c0_15 = arith.constant 0 : index
    %39 = vector.load %arg7[%c0_14, %c0_15] : memref<1x128xf32, #tpu.memory_space<vmem>>, vector<1x128xf32>
    %40 = vector.broadcast %39 : vector<1x128xf32> to vector<32x128xf32>
    %41 = arith.addf %38, %40 : vector<32x128xf32>
    %c0_16 = arith.constant 0 : index
    %c0_17 = arith.constant 0 : index
    %42 = vector.load %arg8[%c0_16, %c0_17] : memref<32x128xf32, #tpu.memory_space<vmem>>, vector<32x128xf32>
    tpu.vector_store %arg8[%c0_16, %c0_17], %41 {strides = array<i32>} : memref<32x128xf32, #tpu.memory_space<vmem>>, vector<32x128xf32>,
    return
  }
  func.func @transform_0(%arg0: i32) -> (i32, i32) {
    %c0_i32 = arith.constant 0 : i32
    %c0_i32_0 = arith.constant 0 : i32
    return %arg0, %c0_i32 : i32, i32
  }
  func.func @transform_1(%arg0: i32) -> (i32, i32) {
    %c0_i32 = arith.constant 0 : i32
    %c0_i32_0 = arith.constant 0 : i32
    %c0_i32_1 = arith.constant 0 : i32
    return %c0_i32, %c0_i32_0 : i32, i32
  }
  func.func @transform_2(%arg0: i32) -> (i32, i32) {
    %c0_i32 = arith.constant 0 : i32
    %c0_i32_0 = arith.constant 0 : i32
    %c0_i32_1 = arith.constant 0 : i32
    return %c0_i32, %c0_i32_0 : i32, i32
  }
  func.func @transform_3(%arg0: i32) -> (i32, i32) {
    %c0_i32 = arith.constant 0 : i32
    %c0_i32_0 = arith.constant 0 : i32
    %c0_i32_1 = arith.constant 0 : i32
    return %c0_i32, %c0_i32_0 : i32, i32
  }
  func.func @transform_4(%arg0: i32) -> (i32, i32) {
    %c0_i32 = arith.constant 0 : i32
    %c0_i32_0 = arith.constant 0 : i32
    %c0_i32_1 = arith.constant 0 : i32
    return %c0_i32, %c0_i32_0 : i32, i32
  }
  func.func @transform_5(%arg0: i32) -> (i32, i32) {
    %c0_i32 = arith.constant 0 : i32
    %c0_i32_0 = arith.constant 0 : i32
    %c0_i32_1 = arith.constant 0 : i32
    return %c0_i32, %c0_i32_0 : i32, i32
  }
  func.func @transform_6(%arg0: i32) -> (i32, i32) {
    %c0_i32 = arith.constant 0 : i32
    %c0_i32_0 = arith.constant 0 : i32
    %c0_i32_1 = arith.constant 0 : i32
    return %c0_i32, %c0_i32_0 : i32, i32
  }
  func.func @transform_7(%arg0: i32) -> (i32, i32) {
    %c0_i32 = arith.constant 0 : i32
    %c0_i32_0 = arith.constant 0 : i32
    return %arg0, %c0_i32 : i32, i32
  }
}

</mosaic_0001>

<llo_original>
// kernel: tpu_custom_call.1
$region0: #{tpu_custom_call.1}
  #allocation0 [shape = 'u32[]', space=smem, size = 0x4, offset = 0x4, fixed_abs, tag = 'smem constant byte address 0x4 - core index']
  #allocation1 [shape = 'u32[72,128]{1,0:T(1,128)}', space=vmem, size = 0x9000, scoped, tag = 'internal scratch']
  %s0 = inlined_call_operand.vmem [shape: f32[32,4], index: 0, kind: input, shape index: {}]
  %s1 = inlined_call_operand.vmem [shape: f32[4,128], index: 1, kind: input, shape index: {}]
  %s2 = inlined_call_operand.vmem [shape: f32[1,128], index: 2, kind: input, shape index: {}]
  %s3 = inlined_call_operand.hbm [shape: f32[128,128], index: 3, kind: input, shape index: {}]
  %s4 = inlined_call_operand.vmem [shape: f32[1,128], index: 4, kind: input, shape index: {}]
  %s5 = inlined_call_operand.hbm [shape: f32[128,128], index: 5, kind: input, shape index: {}]
  %s6 = inlined_call_operand.vmem [shape: f32[1,128], index: 6, kind: input, shape index: {}]
  %s7 = inlined_call_operand.hbm [shape: f32[32,128], index: 7, kind: output, shape index: {}]
  %s8 = sld [smem:[#allocation0]]
  $region46: #{tpu_custom_call.1} parent=0
    _
  %s10 = ssub.s32 1, %s8
  %s11 = scalar_select 0, %s10, %s8
  $region1: #{tpu_custom_call.1} parent=0
    #allocation2 [shape = 'u8[65536]{0}', space=vmem, size = 0x10000, scoped, tag = 'input window, operand 3, single buffered']
    #allocation3 [shape = 's32[1]{0}', space=sflag, size = 0x4, scoped, tag = 'scoped memory for tpu_custom_call.1']
    #allocation4 [shape = 's32[1]{0}', space=sflag, size = 0x4, scoped, tag = 'scoped memory for tpu_custom_call.1']
    #allocation5 [shape = 'u8[65536]{0}', space=vmem, size = 0x10000, scoped, tag = 'input window, operand 5, single buffered']
    #allocation6 [shape = 's32[1]{0}', space=sflag, size = 0x4, scoped, tag = 'scoped memory for tpu_custom_call.1']
    #allocation7 [shape = 'u8[16384]{0}', space=vmem, size = 0x4000, scoped, tag = 'output window, operand 0, single buffered']
    %12 = vsyncpa [#allocation3], 0
    %13 = vsyncpa [#allocation6], 0
    %14 = vsyncpa [#allocation4], 0
    // Predicated region
    $region2: #{tpu_custom_call.1} parent=1 // pred_check
      _
    $region3: #{tpu_custom_call.1} parent=1 // pred_check_branch
      %16 = sbr.rel (0) target = $region5
    $region4: #{tpu_custom_call.1} parent=1 // pred_region
      _
    $region5: #{tpu_custom_call.1} parent=1 // pred_fallthru
      _
    // Predicated region
    $region6: #{tpu_custom_call.1} parent=1 // pred_check
      _
    $region7: #{tpu_custom_call.1} parent=1 // pred_check_branch
      %18 = sbr.rel (0) target = $region9
    $region8: #{tpu_custom_call.1} parent=1 // pred_region
      _
    $region9: #{tpu_custom_call.1} parent=1 // pred_fallthru
      _
    // Predicated region
    $region10: #{tpu_custom_call.1} parent=1 // pred_check
      _
    $region11: #{tpu_custom_call.1} parent=1 // pred_check_branch
      %20 = sbr.rel (0) target = $region13
    $region12: #{tpu_custom_call.1} parent=1 // pred_region
      _
    $region13: #{tpu_custom_call.1} parent=1 // pred_fallthru
      _
    // Predicated region
    $region14: #{tpu_custom_call.1} parent=1 // pred_check
      _
    $region15: #{tpu_custom_call.1} parent=1 // pred_check_branch
      %22 = sbr.rel (0) target = $region17
    $region16: #{tpu_custom_call.1} parent=1 // pred_region
      %24 = vsyncadd [#allocation3], 0
      %s25 = sshll.u32 %s3, 4
      %s26 = int_to_ptr.hbm [resolvable:$true] %s25
      %s27 = sshll.u32 [#allocation2], 4
      %s28 = int_to_ptr.vmem [resolvable:$true] %s27
      %33 = dma.hbm_to_vmem [thread:$0]  %s26, 2048, %s28, [#allocation3], 128, 128, 8
    $region17: #{tpu_custom_call.1} parent=1 // pred_fallthru
      _
    // Predicated region
    $region18: #{tpu_custom_call.1} parent=1 // pred_check
      _
    $region19: #{tpu_custom_call.1} parent=1 // pred_check_branch
      %35 = sbr.rel (0) target = $region21
    $region20: #{tpu_custom_call.1} parent=1 // pred_region
      _
    $region21: #{tpu_custom_call.1} parent=1 // pred_fallthru
      _
    // Predicated region
    $region22: #{tpu_custom_call.1} parent=1 // pred_check
      _
    $region23: #{tpu_custom_call.1} parent=1 // pred_check_branch
      %37 = sbr.rel (0) target = $region25
    $region24: #{tpu_custom_call.1} parent=1 // pred_region
      %39 = vsyncadd [#allocation6], 0
      %s40 = sshll.u32 %s5, 4
      %s41 = int_to_ptr.hbm [resolvable:$true] %s40
      %s42 = sshll.u32 [#allocation5], 4
      %s43 = int_to_ptr.vmem [resolvable:$true] %s42
      %48 = dma.hbm_to_vmem [thread:$0]  %s41, 2048, %s43, [#allocation6], 128, 128, 8
    $region25: #{tpu_custom_call.1} parent=1 // pred_fallthru
      _
    // Predicated region
    $region26: #{tpu_custom_call.1} parent=1 // pred_check
      _
    $region27: #{tpu_custom_call.1} parent=1 // pred_check_branch
      %50 = sbr.rel (0) target = $region29
    $region28: #{tpu_custom_call.1} parent=1 // pred_region
      _
    $region29: #{tpu_custom_call.1} parent=1 // pred_fallthru
      _
    // Predicated region
    $region30: #{tpu_custom_call.1} parent=1 // pred_check
      _
    $region31: #{tpu_custom_call.1} parent=1 // pred_check_branch
      %52 = sbr.rel (0) target = $region33
    $region32: #{tpu_custom_call.1} parent=1 // pred_region
      %54 = dma.done [#allocation3], 2048
    $region33: #{tpu_custom_call.1} parent=1 // pred_fallthru
      _
    // Predicated region
    $region34: #{tpu_custom_call.1} parent=1 // pred_check
      _
    $region35: #{tpu_custom_call.1} parent=1 // pred_check_branch
      %56 = sbr.rel (0) target = $region37
    $region36: #{tpu_custom_call.1} parent=1 // pred_region
      %58 = dma.done [#allocation6], 2048
    $region37: #{tpu_custom_call.1} parent=1 // pred_fallthru
      _
    %v59 = vld [vmem:[%s0] sm:$0xff]
    %v60 = vld [vmem:[%s0 + $0x8] sm:$0xff]
    %v61 = vld [vmem:[%s0 + $0x10] sm:$0xff]
    %v62 = vld [vmem:[%s0 + $0x18] sm:$0xff]
    %v63 = vld [vmem:[%s1] sm:$0xf]
    %v64 = vld [vmem:[%s2] sm:$0x1]
    %66 = vset.pattern.permute.xlu0 0
    %67 = vperm.xlu0 %66, %v59
    %v68 = vpop.permute.xlu0 %67
    %71 = vset.pattern.permute.xlu0 0
    %72 = vperm.xlu0 %71, %v60
    %v73 = vpop.permute.xlu0 %72
    %76 = vset.pattern.permute.xlu0 0
    %77 = vperm.xlu0 %76, %v61
    %v78 = vpop.permute.xlu0 %77
    %81 = vset.pattern.permute.xlu0 0
    %82 = vperm.xlu0 %81, %v62
    %v83 = vpop.permute.xlu0 %82
    %v85 = vperm.slane %v63, 0
    %v86 = vmul.f32 %v68, %v85
    %v87 = vmul.f32 %v73, %v85
    %v88 = vmul.f32 %v78, %v85
    %v89 = vmul.f32 %v83, %v85
    %v91 = vperm.slane %v64, 0
    %v93 = vadd.f32 %v91, %v86
    %v94 = vadd.f32 %v91, %v87
    %v95 = vadd.f32 %v91, %v88
    %v96 = vadd.f32 %v91, %v89
    %97 = vset.pattern.permute.xlu0 1
    %98 = vperm.xlu0 %97, %v59
    %v99 = vpop.permute.xlu0 %98
    %101 = vset.pattern.permute.xlu0 1
    %102 = vperm.xlu0 %101, %v60
    %v103 = vpop.permute.xlu0 %102
    %105 = vset.pattern.permute.xlu0 1
    %106 = vperm.xlu0 %105, %v61
    %v107 = vpop.permute.xlu0 %106
    %109 = vset.pattern.permute.xlu0 1
    %110 = vperm.xlu0 %109, %v62
    %v111 = vpop.permute.xlu0 %110
    %v113 = vperm.slane %v63, 1
    %v114 = vmul.f32 %v99, %v113
    %v115 = vmul.f32 %v103, %v113
    %v116 = vmul.f32 %v107, %v113
    %v117 = vmul.f32 %v111, %v113
    %v118 = vadd.f32 %v93, %v114
    %v119 = vadd.f32 %v94, %v115
    %v120 = vadd.f32 %v95, %v116
    %v121 = vadd.f32 %v96, %v117
    %122 = vset.pattern.permute.xlu0 2
    %123 = vperm.xlu0 %122, %v59
    %v124 = vpop.permute.xlu0 %123
    %126 = vset.pattern.permute.xlu0 2
    %127 = vperm.xlu0 %126, %v60
    %v128 = vpop.permute.xlu0 %127
    %130 = vset.pattern.permute.xlu0 2
    %131 = vperm.xlu0 %130, %v61
    %v132 = vpop.permute.xlu0 %131
    %134 = vset.pattern.permute.xlu0 2
    %135 = vperm.xlu0 %134, %v62
    %v136 = vpop.permute.xlu0 %135
    %v138 = vperm.slane %v63, 2
    %v139 = vmul.f32 %v124, %v138
    %v140 = vmul.f32 %v128, %v138
    %v141 = vmul.f32 %v132, %v138
    %v142 = vmul.f32 %v136, %v138
    %v143 = vadd.f32 %v118, %v139
    %v144 = vadd.f32 %v119, %v140
    %v145 = vadd.f32 %v120, %v141
    %v146 = vadd.f32 %v121, %v142
    %147 = vset.pattern.permute.xlu0 3
    %148 = vperm.xlu0 %147, %v59
    %v149 = vpop.permute.xlu0 %148
    %151 = vset.pattern.permute.xlu0 3
    %152 = vperm.xlu0 %151, %v60
    %v153 = vpop.permute.xlu0 %152
    %155 = vset.pattern.permute.xlu0 3
    %156 = vperm.xlu0 %155, %v61
    %v157 = vpop.permute.xlu0 %156
    %159 = vset.pattern.permute.xlu0 3
    %160 = vperm.xlu0 %159, %v62
    %v161 = vpop.permute.xlu0 %160
    %v163 = vperm.slane %v63, 3
    %v164 = vmul.f32 %v149, %v163
    %v165 = vmul.f32 %v153, %v163
    %v166 = vmul.f32 %v157, %v163
    %v167 = vmul.f32 %v161, %v163
    %v168 = vadd.f32 %v143, %v164
    %v169 = vadd.f32 %v144, %v165
    %v170 = vadd.f32 %v145, %v166
    %v171 = vadd.f32 %v146, %v167
    %v172 = vmax.f32 %v168, 0.0
    %v173 = vmax.f32 %v169, 0.0
    %v174 = vmax.f32 %v170, 0.0
    %v175 = vmax.f32 %v171, 0.0
    %v176 = vld [vmem:[#allocation2] sm:$0xff]
    %v177 = vld [vmem:[#allocation2 + $0x8] sm:$0xff]
    %v178 = vld [vmem:[#allocation2 + $0x10] sm:$0xff]
    %v179 = vld [vmem:[#allocation2 + $0x18] sm:$0xff]
    %v180 = vld [vmem:[#allocation2 + $0x20] sm:$0xff]
    %v181 = vld [vmem:[#allocation2 + $0x28] sm:$0xff]
    %v182 = vld [vmem:[#allocation2 + $0x30] sm:$0xff]
    %v183 = vld [vmem:[#allocation2 + $0x38] sm:$0xff]
    %v184 = vld [vmem:[#allocation2 + $0x40] sm:$0xff]
    %v185 = vld [vmem:[#allocation2 + $0x48] sm:$0xff]
    %v186 = vld [vmem:[#allocation2 + $0x50] sm:$0xff]
    %v187 = vld [vmem:[#allocation2 + $0x58] sm:$0xff]
    %v188 = vld [vmem:[#allocation2 + $0x60] sm:$0xff]
    %v189 = vld [vmem:[#allocation2 + $0x68] sm:$0xff]
    %v190 = vld [vmem:[#allocation2 + $0x70] sm:$0xff]
    %v191 = vld [vmem:[#allocation2 + $0x78] sm:$0xff]
    %v192 = vld [vmem:[%s4] sm:$0x1]
    %v194 = vperm.slane %v192, 0
    %196 = vmatpush.msra.mxu0 %v191
    %197 = vmatpush.msra.mxu0 %v190
    %198 = vmatpush.msra.mxu0 %v189
    %199 = vmatpush.msra.mxu0 %v188
    %200 = vmatpush.msra.mxu0 %v187
    %201 = vmatpush.msra.mxu0 %v186
    %202 = vmatpush.msra.mxu0 %v185
    %203 = vmatpush.msra.mxu0 %v184
    %204 = vmatpush.msra.mxu0 %v183
    %205 = vmatpush.msra.mxu0 %v182
    %206 = vmatpush.msra.mxu0 %v181
    %207 = vmatpush.msra.mxu0 %v180
    %208 = vmatpush.msra.mxu0 %v179
    %209 = vmatpush.msra.mxu0 %v178
    %210 = vmatpush.msra.mxu0 %v177
    %211 = vmatpush.msra.mxu0 %v176
    %212 = vmatmul.f32.gmra.mxu0 %v172
    %v213 = vpop.f32.mrf.mxu0
    %v214 = vadd.f32 %v194, %v213
    %215 = vmatmul.f32.gmra.mxu0 %v173
    %v216 = vpop.f32.mrf.mxu0
    %v217 = vadd.f32 %v194, %v216
    %218 = vmatmul.f32.gmra.mxu0 %v174
    %v219 = vpop.f32.mrf.mxu0
    %v220 = vadd.f32 %v194, %v219
    %221 = vmatmul.f32.gmra.mxu0 %v175
    %v222 = vpop.f32.mrf.mxu0
    %v223 = vadd.f32 %v194, %v222
    %224 = vdwg.mxu0
    %v225 = vmax.f32 %v214, 0.0
    %v226 = vmax.f32 %v217, 0.0
    %v227 = vmax.f32 %v220, 0.0
    %v228 = vmax.f32 %v223, 0.0
    %v229 = vld [vmem:[#allocation5] sm:$0xff]
    %v230 = vld [vmem:[#allocation5 + $0x8] sm:$0xff]
    %v231 = vld [vmem:[#allocation5 + $0x10] sm:$0xff]
    %v232 = vld [vmem:[#allocation5 + $0x18] sm:$0xff]
    %v233 = vld [vmem:[#allocation5 + $0x20] sm:$0xff]
    %v234 = vld [vmem:[#allocation5 + $0x28] sm:$0xff]
    %v235 = vld [vmem:[#allocation5 + $0x30] sm:$0xff]
    %v236 = vld [vmem:[#allocation5 + $0x38] sm:$0xff]
    %v237 = vld [vmem:[#allocation5 + $0x40] sm:$0xff]
    %v238 = vld [vmem:[#allocation5 + $0x48] sm:$0xff]
    %v239 = vld [vmem:[#allocation5 + $0x50] sm:$0xff]
    %v240 = vld [vmem:[#allocation5 + $0x58] sm:$0xff]
    %v241 = vld [vmem:[#allocation5 + $0x60] sm:$0xff]
    %v242 = vld [vmem:[#allocation5 + $0x68] sm:$0xff]
    %v243 = vld [vmem:[#allocation5 + $0x70] sm:$0xff]
    %v244 = vld [vmem:[#allocation5 + $0x78] sm:$0xff]
    %v245 = vld [vmem:[%s6] sm:$0x1]
    %v247 = vperm.slane %v245, 0
    %249 = vmatpush.msra.mxu0 %v244
    %250 = vmatpush.msra.mxu0 %v243
    %251 = vmatpush.msra.mxu0 %v242
    %252 = vmatpush.msra.mxu0 %v241
    %253 = vmatpush.msra.mxu0 %v240
    %254 = vmatpush.msra.mxu0 %v239
    %255 = vmatpush.msra.mxu0 %v238
    %256 = vmatpush.msra.mxu0 %v237
    %257 = vmatpush.msra.mxu0 %v236
    %258 = vmatpush.msra.mxu0 %v235
    %259 = vmatpush.msra.mxu0 %v234
    %260 = vmatpush.msra.mxu0 %v233
    %261 = vmatpush.msra.mxu0 %v232
    %262 = vmatpush.msra.mxu0 %v231
    %263 = vmatpush.msra.mxu0 %v230
    %264 = vmatpush.msra.mxu0 %v229
    %265 = vmatmul.f32.gmra.mxu0 %v225
    %v266 = vpop.f32.mrf.mxu0
    %v267 = vadd.f32 %v247, %v266
    %268 = vmatmul.f32.gmra.mxu0 %v226
    %v269 = vpop.f32.mrf.mxu0
    %v270 = vadd.f32 %v247, %v269
    %271 = vmatmul.f32.gmra.mxu0 %v227
    %v272 = vpop.f32.mrf.mxu0
    %v273 = vadd.f32 %v247, %v272
    %274 = vmatmul.f32.gmra.mxu0 %v228
    %v275 = vpop.f32.mrf.mxu0
    %v276 = vadd.f32 %v247, %v275
    %277 = vdwg.mxu0
    %278 = vst [vmem:[#allocation7] sm:$0xff] %v267
    %279 = vst [vmem:[#allocation7 + $0x8] sm:$0xff] %v270
    %280 = vst [vmem:[#allocation7 + $0x10] sm:$0xff] %v273
    %281 = vst [vmem:[#allocation7 + $0x18] sm:$0xff] %v276
    // Predicated region
    $region38: #{tpu_custom_call.1} parent=1 // pred_check
      _
    $region39: #{tpu_custom_call.1} parent=1 // pred_check_branch
      %283 = sbr.rel (0) target = $region41
    $region40: #{tpu_custom_call.1} parent=1 // pred_region
      %285 = vsyncadd [#allocation4], 0
      %s286 = sshll.u32 [#allocation7], 4
      %s287 = int_to_ptr.vmem [resolvable:$true] %s286
      %s288 = sshll.u32 %s7, 4
      %s289 = int_to_ptr.hbm [resolvable:$true] %s288
      %294 = dma.vmem_to_hbm [thread:$0]  %s287, 512, %s289, [#allocation4], 128, 128, 8
    $region41: #{tpu_custom_call.1} parent=1 // pred_fallthru
      _
    // Predicated region
    $region42: #{tpu_custom_call.1} parent=1 // pred_check
      _
    $region43: #{tpu_custom_call.1} parent=1 // pred_check_branch
      %296 = sbr.rel (0) target = $region45
    $region44: #{tpu_custom_call.1} parent=1 // pred_region
      %298 = dma.done [#allocation4], 512
    $region45: #{tpu_custom_call.1} parent=1 // pred_fallthru
      _
    %299 = vsyncpa [#allocation3], 1
    %300 = vsyncpa [#allocation6], 1
    %301 = vsyncpa [#allocation4], 1

</llo_original>
